<compile_context>
chip_gen: v5e
topology: v5e:2x2
jax: 0.10.0
libtpu: 0.0.40
codegen_flags: <defaults>
</compile_context>

<pallas_src>
import functools

import jax
import jax.numpy as jnp
from jax.experimental import pallas as pl
from jax.experimental.pallas import tpu as pltpu

LANE = 128


def _softshrink_kernel(x_ref, o_ref, *, lambd):
    x = x_ref[...]
    lam = jnp.asarray(lambd, dtype=x.dtype)
    zero = jnp.zeros((), dtype=x.dtype)
    # Branchy definition: matches PyTorch semantics (NaN -> 0). lambd >= 0.
    o_ref[...] = jnp.where(x > lam, x - lam,
                           jnp.where(x < -lam, x + lam, zero))


def _sublane_align(dtype) -> int:
    # Native sublane packing: f32 -> 8, bf16/f16 -> 16, int8/fp8 -> 32.
    itemsize = jnp.dtype(dtype).itemsize
    return 8 * max(1, 4 // itemsize)


def _tpu_budgets():
    """Return (block_bytes, vmem_limit_cap_bytes) chosen per TPU generation."""
    vmem_cap = None
    try:
        info = pltpu.get_tpu_info()
        vmem_cap = getattr(info, "vmem_capacity_bytes", None)
    except Exception:
        vmem_cap = None
    if vmem_cap is None:
        vmem_cap = 64 << 20  # conservative (v7x per-TensorCore VMEM)
    if vmem_cap >= (96 << 20):
        # v5e / v6e: 128 MiB physical VMEM -> big blocks, generous limit.
        return 8 << 20, 48 << 20
    # v7x: 64 MiB physical VMEM per TensorCore -> slightly smaller but still
    # large blocks; 4x block footprint (~24 MiB) fits comfortably.
    return 6 << 20, 40 << 20


def _pick_width(n, sub):
    """Widest lane-dense width dividing n, preferring >= sub rows."""
    candidates = (8192, 4096, 2048, 1024, 512, 256, 128)
    for w in candidates:
        if n % w == 0 and n // w >= sub:
            return w
    for w in candidates:
        if n % w == 0:
            return w
    return LANE


def _run_2d(x2d, lambd, block_bytes, vmem_cap):
    """Run the elementwise kernel over a (rows, width) lane-dense slab."""
    rows, width = x2d.shape
    dtype = x2d.dtype
    itemsize = jnp.dtype(dtype).itemsize
    sub = _sublane_align(dtype)

    if rows <= sub:
        tr = rows  # block equals full row extent (always legal)
    else:
        tr = max(block_bytes // (width * itemsize), sub)
        tr = (tr // sub) * sub
        if tr >= rows:
            if rows >= 2 * sub:
                # Whole tensor fits one block: split ~in half (sublane-aligned,
                # partial last block masked) so a megacore uses both cores.
                tr = sub * pl.cdiv(pl.cdiv(rows, 2), sub)
            else:
                tr = rows

    grid = (pl.cdiv(rows, tr),)
    block_actual = tr * width * itemsize
    vmem_limit = int(min(vmem_cap, max(16 << 20, 6 * block_actual)))

    kernel = functools.partial(_softshrink_kernel, lambd=float(lambd))

    return pl.pallas_call(
        kernel,
        out_shape=jax.ShapeDtypeStruct((rows, width), dtype),
        grid_spec=pltpu.PrefetchScalarGridSpec(
            num_scalar_prefetch=0,
            grid=grid,
            in_specs=[pl.BlockSpec((tr, width), lambda i: (i, 0))],
            out_specs=pl.BlockSpec((tr, width), lambda i: (i, 0)),
        ),
        compiler_params=pltpu.CompilerParams(
            dimension_semantics=("parallel",),
            vmem_limit_bytes=vmem_limit,
        ),
    )(x2d)


def mps_softshrink(x: jax.Array, lambd: float = 0.5) -> jax.Array:
    """Elementwise softshrink. x: any shape; returns same shape/dtype.

    Matches PyTorch nn.Softshrink semantics; lambd must be >= 0.
    """
    orig_shape = x.shape
    dtype = x.dtype
    n = x.size
    if n == 0:
        return x

    itemsize = jnp.dtype(dtype).itemsize
    sub = _sublane_align(dtype)
    block_bytes, vmem_cap = _tpu_budgets()

    x_flat = jnp.ravel(x)  # free (metadata-only) for contiguous row-major

    if n % LANE == 0:
        # Common case: pure reshape to a wide lane-dense slab, no padding.
        width = _pick_width(n, sub)
        out2d = _run_2d(x_flat.reshape(n // width, width), lambd,
                        block_bytes, vmem_cap)
        return out2d.reshape(orig_shape)

    if n * itemsize <= block_bytes:
        # Small ragged tensor: single whole-array block, masked lanes.
        # No pad pass, no output-slice pass.
        out2d = _run_2d(x_flat.reshape(1, n), lambd, block_bytes, vmem_cap)
        return out2d.reshape(orig_shape)

    # Large ragged tensor (rare): pad straight to a wide lane width (the pad
    # pass costs the same regardless of pad amount) and slice the tail off.
    # Zero padding is benign: softshrink(0) == 0.
    width = 8192
    pad = (-n) % width
    x_pad = jnp.pad(x_flat, (0, pad))
    out2d = _run_2d(x_pad.reshape((n + pad) // width, width), lambd,
                    block_bytes, vmem_cap)
    return out2d.reshape(-1)[:n].reshape(orig_shape)


def softshrink_ref(x, lambd=0.5):
    lam = jnp.asarray(lambd, dtype=x.dtype)
    return jnp.where(x > lam, x - lam,
                     jnp.where(x < -lam, x + lam, jnp.zeros_like(x)))


if __name__ == "__main__":
    key = jax.random.PRNGKey(0)
    # NCHW input, small shape (batch=2, channels=4, spatial=16x16)
    x = jax.random.normal(key, (2, 4, 16, 16), dtype=jnp.float32)

    lambd = 0.5
    y = jax.block_until_ready(mps_softshrink(x, lambd))
    y_ref = softshrink_ref(x, lambd)
    assert y.shape == x.shape and y.dtype == x.dtype
    assert jnp.allclose(y, y_ref, atol=1e-6, rtol=1e-6), "mismatch vs reference"

    # Ragged size: exercises the small-ragged whole-array (masked-lane) path,
    # which now avoids any pad / output-slice HBM passes.
    x2 = jax.random.normal(jax.random.PRNGKey(1), (3, 5, 7, 11), dtype=jnp.float32)
    y2 = jax.block_until_ready(mps_softshrink(x2, 0.25))
    assert jnp.allclose(y2, softshrink_ref(x2, 0.25), atol=1e-6, rtol=1e-6)

    print("KERNEL_OK")
</pallas_src>

<mosaic_0001>
module attributes {stable_mosaic.version = 11 : i64} {
  func.func @_softshrink_kernel(%arg0: i32, %arg1: memref<8x256xf32, #tpu.memory_space<vmem>>, %arg2: memref<8x256xf32, #tpu.memory_space<vmem>>) attributes {dimension_semantics = [#tpu.dimension_semantics<parallel>], iteration_bounds = array<i64: 1>, scalar_prefetch = 0 : i64, scratch_operands = 0 : i64, tpu.core_type = #tpu.core_type<tc>, window_params = [{transform_indices = @transform_0, window_bounds = array<i64: 8, 256>}, {transform_indices = @transform_1, window_bounds = array<i64: 8, 256>}]} {
    %c0 = arith.constant 0 : index
    %c0_0 = arith.constant 0 : index
    %0 = vector.load %arg1[%c0, %c0_0] : memref<8x256xf32, #tpu.memory_space<vmem>>, vector<8x256xf32>
    %cst = arith.constant 5.000000e-01 : f32
    %1 = vector.broadcast %cst : f32 to vector<8x256xf32>
    %2 = arith.cmpf ogt, %0, %1 : vector<8x256xf32>
    %cst_1 = arith.constant 5.000000e-01 : f32
    %3 = vector.broadcast %cst_1 : f32 to vector<8x256xf32>
    %4 = arith.subf %0, %3 : vector<8x256xf32>
    %cst_2 = arith.constant 0.000000e+00 : f32
    %cst_3 = arith.constant 5.000000e-01 : f32
    %5 = arith.subf %cst_2, %cst_3 : f32
    %6 = vector.broadcast %5 : f32 to vector<8x256xf32>
    %7 = arith.cmpf olt, %0, %6 : vector<8x256xf32>
    %cst_4 = arith.constant 5.000000e-01 : f32
    %8 = vector.broadcast %cst_4 : f32 to vector<8x256xf32>
    %9 = arith.addf %0, %8 : vector<8x256xf32>
    %cst_5 = arith.constant 0.000000e+00 : f32
    %10 = vector.broadcast %cst_5 : f32 to vector<8x256xf32>
    %11 = arith.select %7, %9, %10 : vector<8x256xi1>, vector<8x256xf32>
    %12 = arith.select %2, %4, %11 : vector<8x256xi1>, vector<8x256xf32>
    %c0_6 = arith.constant 0 : index
    %c0_7 = arith.constant 0 : index
    %13 = vector.load %arg2[%c0_6, %c0_7] : memref<8x256xf32, #tpu.memory_space<vmem>>, vector<8x256xf32>
    tpu.vector_store %arg2[%c0_6, %c0_7], %12 {strides = array<i32>} : memref<8x256xf32, #tpu.memory_space<vmem>>, vector<8x256xf32>,
    return
  }
  func.func @transform_0(%arg0: i32) -> (i32, i32) {
    %c0_i32 = arith.constant 0 : i32
    %c0_i32_0 = arith.constant 0 : i32
    return %arg0, %c0_i32 : i32, i32
  }
  func.func @transform_1(%arg0: i32) -> (i32, i32) {
    %c0_i32 = arith.constant 0 : i32
    %c0_i32_0 = arith.constant 0 : i32
    return %arg0, %c0_i32 : i32, i32
  }
}

</mosaic_0001>

<llo_original>
// kernel: tpu_custom_call.1
$region0: #{tpu_custom_call.1}
  #allocation0 [shape = 'u32[]', space=smem, size = 0x4, offset = 0x4, fixed_abs, tag = 'smem constant byte address 0x4 - core index']
  #allocation1 [shape = 'u32[72,128]{1,0:T(1,128)}', space=vmem, size = 0x9000, scoped, tag = 'internal scratch']
  %s0 = inlined_call_operand.hbm [shape: f32[8,256], index: 0, kind: input, shape index: {}]
  %s1 = inlined_call_operand.hbm [shape: f32[8,256], index: 1, kind: output, shape index: {}]
  %s2 = sld [smem:[#allocation0]]
  $region18: #{tpu_custom_call.1} parent=0
    _
  %s4 = ssub.s32 1, %s2
  %s5 = scalar_select 0, %s4, %s2
  $region1: #{tpu_custom_call.1} parent=0
    #allocation2 [shape = 'u8[8192]{0}', space=vmem, size = 0x2000, scoped, tag = 'input window, operand 0, single buffered']
    #allocation3 [shape = 's32[1]{0}', space=sflag, size = 0x4, scoped, tag = 'scoped memory for tpu_custom_call.1']
    #allocation4 [shape = 's32[1]{0}', space=sflag, size = 0x4, scoped, tag = 'scoped memory for tpu_custom_call.1']
    #allocation5 [shape = 'u8[8192]{0}', space=vmem, size = 0x2000, scoped, tag = 'output window, operand 0, single buffered']
    %6 = vsyncpa [#allocation3], 0
    %7 = vsyncpa [#allocation4], 0
    // Predicated region
    $region2: #{tpu_custom_call.1} parent=1 // pred_check
      _
    $region3: #{tpu_custom_call.1} parent=1 // pred_check_branch
      %9 = sbr.rel (0) target = $region5
    $region4: #{tpu_custom_call.1} parent=1 // pred_region
      %11 = vsyncadd [#allocation3], 0
      %s13 = sshll.u32 %s0, 4
      %s14 = int_to_ptr.hbm [resolvable:$true] %s13
      %s15 = sshll.u32 [#allocation2], 4
      %s16 = int_to_ptr.vmem [resolvable:$true] %s15
      %18 = dma.hbm_to_vmem [thread:$0]  %s14, 256, %s16, [#allocation3]
    $region5: #{tpu_custom_call.1} parent=1 // pred_fallthru
      _
    // Predicated region
    $region6: #{tpu_custom_call.1} parent=1 // pred_check
      _
    $region7: #{tpu_custom_call.1} parent=1 // pred_check_branch
      %20 = sbr.rel (0) target = $region9
    $region8: #{tpu_custom_call.1} parent=1 // pred_region
      %22 = dma.done [#allocation3], 256
    $region9: #{tpu_custom_call.1} parent=1 // pred_fallthru
      _
    %v23 = vld [vmem:[#allocation2] sm:$0xff]
    %v24 = vld [vmem:[#allocation2 + $0x8] sm:$0xff]
    %vm25 = vcmp.gt.f32.partialorder %v23, 0.5
    %vm26 = vcmp.gt.f32.partialorder %v24, 0.5
    %v27 = vsub.f32 %v23, 0.5
    %v28 = vsub.f32 %v24, 0.5
    %vm29 = vcmp.lt.f32.partialorder %v23, -0.5
    %vm30 = vcmp.lt.f32.partialorder %v24, -0.5
    %v31 = vadd.f32 %v23, 0.5
    %v32 = vadd.f32 %v24, 0.5
    %v33 = vsel %vm29, %v31, 0.0
    %v34 = vsel %vm30, %v32, 0.0
    %v35 = vsel %vm25, %v27, %v33
    %v36 = vsel %vm26, %v28, %v34
    %37 = vst [vmem:[#allocation5] sm:$0xff] %v35
    %38 = vst [vmem:[#allocation5 + $0x8] sm:$0xff] %v36
    // Predicated region
    $region10: #{tpu_custom_call.1} parent=1 // pred_check
      _
    $region11: #{tpu_custom_call.1} parent=1 // pred_check_branch
      %40 = sbr.rel (0) target = $region13
    $region12: #{tpu_custom_call.1} parent=1 // pred_region
      %42 = vsyncadd [#allocation4], 0
      %s44 = sshll.u32 [#allocation5], 4
      %s45 = int_to_ptr.vmem [resolvable:$true] %s44
      %s46 = sshll.u32 %s1, 4
      %s47 = int_to_ptr.hbm [resolvable:$true] %s46
      %49 = dma.vmem_to_hbm [thread:$0]  %s45, 256, %s47, [#allocation4]
    $region13: #{tpu_custom_call.1} parent=1 // pred_fallthru
      _
    // Predicated region
    $region14: #{tpu_custom_call.1} parent=1 // pred_check
      _
    $region15: #{tpu_custom_call.1} parent=1 // pred_check_branch
      %51 = sbr.rel (0) target = $region17
    $region16: #{tpu_custom_call.1} parent=1 // pred_region
      %53 = dma.done [#allocation4], 256
    $region17: #{tpu_custom_call.1} parent=1 // pred_fallthru
      _
    %54 = vsyncpa [#allocation3], 1
    %55 = vsyncpa [#allocation4], 1

</llo_original>
